<compile_context>
chip_gen: v6e
topology: v6e:2x2x1
jax: 0.10.0
libtpu: 0.0.40
codegen_flags: <defaults>
</compile_context>

<pallas_src>
import jax
import jax.numpy as jnp
from jax.experimental import pallas as pl
from jax.experimental.pallas import tpu as pltpu


# ----------------------------- Pallas kernel -----------------------------

def _ln_cnn_kernel(eps_ref, x_ref, g_ref, b_ref, o_ref):
    # eps_ref: (1,) f32 scalar in SMEM.
    # x_ref:   (bn, C*H*W) tile holding `bn` full samples; lane axis = C*H*W (lane-dense).
    # g_ref/b_ref: (1, C*H*W) f32 pre-broadcast per-channel affine.
    eps = eps_ref[0]
    x = x_ref[...].astype(jnp.float32)
    # Per-sample statistics over (C, H, W); biased variance (unbiased=False).
    mean = jnp.mean(x, axis=-1, keepdims=True)
    xm = x - mean                                   # hoisted; reused for var and normalize
    var = jnp.mean(xm * xm, axis=-1, keepdims=True)
    y = xm * jax.lax.rsqrt(var + eps)
    o_ref[...] = (y * g_ref[...] + b_ref[...]).astype(o_ref.dtype)


def layernorm_cnn(x, gamma, beta, eps=1e-5, *, vmem_budget_bytes=10 * 1024 * 1024):
    """LayerNormCNN forward.

    x:     (N, C, H, W) NCHW, PyTorch convention.
    gamma: (C,)-reshapable learnable scale (nn.Parameter(1, C, 1, 1) equivalent).
    beta:  (C,)-reshapable learnable shift.
    eps:   python float or traced scalar.
    Normalizes each sample over (C, H, W), then applies per-channel scale/shift.
    """
    n, c, h, w = x.shape
    hw = h * w
    chw = c * hw
    xr = x.reshape(n, chw)                           # lane-dense 2D view

    # Per-channel affine pre-broadcast to the kernel's lane-dense layout (tiny, ~4 KB).
    g2d = jnp.broadcast_to(
        jnp.asarray(gamma, jnp.float32).reshape(c, 1), (c, hw)).reshape(1, chw)
    b2d = jnp.broadcast_to(
        jnp.asarray(beta, jnp.float32).reshape(c, 1), (c, hw)).reshape(1, chw)
    eps_arr = jnp.asarray(eps, jnp.float32).reshape(1)

    # --- batch-tile sizing ---
    # Per sample per grid step: 2x double-buffered input + 2x output blocks in x.dtype,
    # plus ~2x f32 in-kernel working set (upcast + centered copy).
    itemsize = x.dtype.itemsize
    per_sample_bytes = 4 * chw * itemsize + 2 * chw * 4
    bn_budget = max(1, int(vmem_budget_bytes // per_sample_bytes))
    sub = 8 if itemsize >= 4 else 16                 # full sublane tiles -> unmasked vld/vst
    if n <= sub:
        bn = n                                       # block dim == full array dim (allowed)
    else:
        bn = min(bn_budget, n)
        bn = min(bn, -(-n // 2))                     # >=2 grid steps so v7x's 2nd TC has work
        bn = max(sub, (bn // sub) * sub)
    grid = (pl.cdiv(n, bn),)

    out = pl.pallas_call(
        _ln_cnn_kernel,
        out_shape=jax.ShapeDtypeStruct((n, chw), x.dtype),
        grid=grid,
        in_specs=[
            pl.BlockSpec(memory_space=pltpu.MemorySpace.SMEM),     # eps scalar
            pl.BlockSpec((bn, chw), lambda i: (i, 0)),             # x tile
            pl.BlockSpec((1, chw), lambda i: (0, 0)),              # gamma (resident)
            pl.BlockSpec((1, chw), lambda i: (0, 0)),              # beta  (resident)
        ],
        out_specs=pl.BlockSpec((bn, chw), lambda i: (i, 0)),
        compiler_params=pltpu.CompilerParams(
            dimension_semantics=("parallel",),       # megacore sharding over batch on v7x
        ),
    )(eps_arr, xr, g2d, b2d)
    return out.reshape(n, c, h, w)


def simple_feature_processor_forward(params, x):
    """forward(x) = LayerNormCNN(feature_dim)(x)."""
    return layernorm_cnn(x, params["gamma"], params["beta"], params["eps"])


def init_simple_feature_processor(feature_dim, eps=1e-5):
    # Matches LayerNormCNN.__init__: weight = ones(1, C, 1, 1), bias = zeros(1, C, 1, 1).
    return {
        "gamma": jnp.ones((feature_dim,), jnp.float32),
        "beta": jnp.zeros((feature_dim,), jnp.float32),
        "eps": eps,
    }


# ----------------------------- Pure-JAX reference (for verification) -----------------------------

def _reference_forward(x, gamma, beta, eps=1e-5):
    mean = jnp.mean(x, axis=(1, 2, 3), keepdims=True)
    var = jnp.mean(jnp.square(x - mean), axis=(1, 2, 3), keepdims=True)  # unbiased=False
    normalized = (x - mean) / jnp.sqrt(var + eps)
    c = gamma.reshape(-1).shape[0]
    return gamma.reshape(1, c, 1, 1) * normalized + beta.reshape(1, c, 1, 1)


# ----------------------------- Demo -----------------------------

if __name__ == "__main__":
    key = jax.random.PRNGKey(0)
    kx, kg, kb = jax.random.split(key, 3)

    # SimpleFeatureProcessor(feature_dim=4) on a (batch=2, C=4, 16, 16) NCHW feature map.
    batch, feature_dim, height, width = 2, 4, 16, 16
    x = jax.random.normal(kx, (batch, feature_dim, height, width), jnp.float32)

    params = init_simple_feature_processor(feature_dim)
    # Perturb the learnable affine so the per-channel scale/shift path is exercised.
    params["gamma"] = params["gamma"] + 0.1 * jax.random.normal(kg, (feature_dim,), jnp.float32)
    params["beta"] = params["beta"] + 0.05 * jax.random.normal(kb, (feature_dim,), jnp.float32)

    fwd = jax.jit(simple_feature_processor_forward)
    out = fwd(params, x)
    jax.block_until_ready(out)

    assert out.shape == x.shape, out.shape
    assert bool(jnp.all(jnp.isfinite(out)))

    ref = _reference_forward(x, params["gamma"], params["beta"], eps=params["eps"])
    assert bool(jnp.allclose(out, ref, atol=2e-5, rtol=2e-5)), float(jnp.max(jnp.abs(out - ref)))

    print("KERNEL_OK")
</pallas_src>

<mosaic_0001>
module attributes {stable_mosaic.version = 11 : i64} {
  func.func @_ln_cnn_kernel(%arg0: i32, %arg1: memref<1xf32, #tpu.memory_space<smem>>, %arg2: memref<2x1024xf32, #tpu.memory_space<vmem>>, %arg3: memref<1x1024xf32, #tpu.memory_space<vmem>>, %arg4: memref<1x1024xf32, #tpu.memory_space<vmem>>, %arg5: memref<2x1024xf32, #tpu.memory_space<vmem>>) attributes {dimension_semantics = [#tpu.dimension_semantics<parallel>], iteration_bounds = array<i64: 1>, scalar_prefetch = 0 : i64, scratch_operands = 0 : i64, tpu.core_type = #tpu.core_type<tc>, window_params = [{transform_indices = @transform_0, window_bounds = array<i64: 1>}, {transform_indices = @transform_1, window_bounds = array<i64: 2, 1024>}, {pipeline_mode = #tpu.pipeline_mode<synchronous>, transform_indices = @transform_2, window_bounds = array<i64: 1, 1024>}, {pipeline_mode = #tpu.pipeline_mode<synchronous>, transform_indices = @transform_3, window_bounds = array<i64: 1, 1024>}, {transform_indices = @transform_4, window_bounds = array<i64: 2, 1024>}]} {
    %c0 = arith.constant 0 : index
    %0 = memref.load %arg1[%c0] : memref<1xf32, #tpu.memory_space<smem>>
    %c0_0 = arith.constant 0 : index
    %c0_1 = arith.constant 0 : index
    %1 = vector.load %arg2[%c0_0, %c0_1] : memref<2x1024xf32, #tpu.memory_space<vmem>>, vector<2x1024xf32>
    %cst = arith.constant dense<0.000000e+00> : vector<2xf32>
    %2 = vector.multi_reduction <add>, %1, %cst [1] : vector<2x1024xf32> to vector<2xf32>
    %3 = vector.shape_cast %2 : vector<2xf32> to vector<2x1xf32>
    %cst_2 = arith.constant 1.024000e+03 : f32
    %4 = vector.broadcast %cst_2 : f32 to vector<2x1xf32>
    %5 = arith.divf %3, %4 : vector<2x1xf32>
    %6 = vector.broadcast %5 : vector<2x1xf32> to vector<2x1024xf32>
    %7 = arith.subf %1, %6 : vector<2x1024xf32>
    %8 = arith.mulf %7, %7 : vector<2x1024xf32>
    %cst_3 = arith.constant dense<0.000000e+00> : vector<2xf32>
    %9 = vector.multi_reduction <add>, %8, %cst_3 [1] : vector<2x1024xf32> to vector<2xf32>
    %10 = vector.shape_cast %9 : vector<2xf32> to vector<2x1xf32>
    %cst_4 = arith.constant 1.024000e+03 : f32
    %11 = vector.broadcast %cst_4 : f32 to vector<2x1xf32>
    %12 = arith.divf %10, %11 : vector<2x1xf32>
    %13 = vector.broadcast %0 : f32 to vector<2x1xf32>
    %14 = arith.addf %12, %13 : vector<2x1xf32>
    %15 = math.rsqrt %14 : vector<2x1xf32>
    %16 = vector.broadcast %15 : vector<2x1xf32> to vector<2x1024xf32>
    %17 = arith.mulf %7, %16 : vector<2x1024xf32>
    %c0_5 = arith.constant 0 : index
    %c0_6 = arith.constant 0 : index
    %18 = vector.load %arg3[%c0_5, %c0_6] : memref<1x1024xf32, #tpu.memory_space<vmem>>, vector<1x1024xf32>
    %19 = vector.broadcast %18 : vector<1x1024xf32> to vector<2x1024xf32>
    %20 = arith.mulf %17, %19 : vector<2x1024xf32>
    %c0_7 = arith.constant 0 : index
    %c0_8 = arith.constant 0 : index
    %21 = vector.load %arg4[%c0_7, %c0_8] : memref<1x1024xf32, #tpu.memory_space<vmem>>, vector<1x1024xf32>
    %22 = vector.broadcast %21 : vector<1x1024xf32> to vector<2x1024xf32>
    %23 = arith.addf %20, %22 : vector<2x1024xf32>
    %c0_9 = arith.constant 0 : index
    %c0_10 = arith.constant 0 : index
    %24 = vector.load %arg5[%c0_9, %c0_10] : memref<2x1024xf32, #tpu.memory_space<vmem>>, vector<2x1024xf32>
    tpu.vector_store %arg5[%c0_9, %c0_10], %23 {strides = array<i32>} : memref<2x1024xf32, #tpu.memory_space<vmem>>, vector<2x1024xf32>,
    return
  }
  func.func @transform_0(%arg0: i32) -> i32 {
    %c0_i32 = arith.constant 0 : i32
    %c0_i32_0 = arith.constant 0 : i32
    return %c0_i32 : i32
  }
  func.func @transform_1(%arg0: i32) -> (i32, i32) {
    %c0_i32 = arith.constant 0 : i32
    %c0_i32_0 = arith.constant 0 : i32
    return %arg0, %c0_i32 : i32, i32
  }
  func.func @transform_2(%arg0: i32) -> (i32, i32) {
    %c0_i32 = arith.constant 0 : i32
    %c0_i32_0 = arith.constant 0 : i32
    %c0_i32_1 = arith.constant 0 : i32
    return %c0_i32, %c0_i32_0 : i32, i32
  }
  func.func @transform_3(%arg0: i32) -> (i32, i32) {
    %c0_i32 = arith.constant 0 : i32
    %c0_i32_0 = arith.constant 0 : i32
    %c0_i32_1 = arith.constant 0 : i32
    return %c0_i32, %c0_i32_0 : i32, i32
  }
  func.func @transform_4(%arg0: i32) -> (i32, i32) {
    %c0_i32 = arith.constant 0 : i32
    %c0_i32_0 = arith.constant 0 : i32
    return %arg0, %c0_i32 : i32, i32
  }
}

</mosaic_0001>

<llo_original>
// kernel: simple_feature_processor_forward.1
$region0: #{simple_feature_processor_forward.1}
  #allocation0 [shape = 'u32[]', space=smem, size = 0x4, offset = 0x4, fixed_abs, tag = 'smem constant byte address 0x4 - core index']
  #allocation1 [shape = 'u32[144,128]{1,0:T(1,128)}', space=vmem, size = 0x12000, scoped, tag = 'internal scratch']
  #allocation2 [shape = 'f32[1]{0:T(128)S(6)}', space=smem, size = 0x200, scoped, tag = 'scoped memory for simple_feature_processor_forward.1']
  %s0 = inlined_call_operand.<no memory space> [shape: f32[1], index: 0, kind: input, shape index: {}]
  %s1 = inlined_call_operand.vmem [shape: f32[2,1024], index: 1, kind: input, shape index: {}]
  %s2 = inlined_call_operand.vmem [shape: f32[1,1024], index: 2, kind: input, shape index: {}]
  %s3 = inlined_call_operand.vmem [shape: f32[1,1024], index: 3, kind: input, shape index: {}]
  %s4 = inlined_call_operand.vmem [shape: f32[2,1024], index: 4, kind: output, shape index: {}]
  %s5 = sld [smem:[#allocation0]]
  $region26: #{simple_feature_processor_forward.1} parent=0
    _
  %s7 = ssub.s32 1, %s5
  %s8 = scalar_select 0, %s7, %s5
  %9 = sst [smem:[#allocation2]] %s0
  // Predicated region
  $region2: #{simple_feature_processor_forward.1} parent=0 // pred_check
    _
  $region3: #{simple_feature_processor_forward.1} parent=0 // pred_check_branch
    %11 = sbr.rel (0) target = $region5
  $region4: #{simple_feature_processor_forward.1} parent=0 // pred_region
    _
  $region5: #{simple_feature_processor_forward.1} parent=0 // pred_fallthru
    _
  // Predicated region
  $region6: #{simple_feature_processor_forward.1} parent=0 // pred_check
    _
  $region7: #{simple_feature_processor_forward.1} parent=0 // pred_check_branch
    %13 = sbr.rel (0) target = $region9
  $region8: #{simple_feature_processor_forward.1} parent=0 // pred_region
    _
  $region9: #{simple_feature_processor_forward.1} parent=0 // pred_fallthru
    _
  // Predicated region
  $region10: #{simple_feature_processor_forward.1} parent=0 // pred_check
    _
  $region11: #{simple_feature_processor_forward.1} parent=0 // pred_check_branch
    %15 = sbr.rel (0) target = $region13
  $region12: #{simple_feature_processor_forward.1} parent=0 // pred_region
    _
  $region13: #{simple_feature_processor_forward.1} parent=0 // pred_fallthru
    _
  // Predicated region
  $region14: #{simple_feature_processor_forward.1} parent=0 // pred_check
    _
  $region15: #{simple_feature_processor_forward.1} parent=0 // pred_check_branch
    %17 = sbr.rel (0) target = $region17
  $region16: #{simple_feature_processor_forward.1} parent=0 // pred_region
    _
  $region17: #{simple_feature_processor_forward.1} parent=0 // pred_fallthru
    _
  %s18 = sld [smem:[#allocation2]]
  %v19 = vld [vmem:[%s1] sm:$0xff]
  %v20 = vld [vmem:[%s1 + $0x8] sm:$0xff]
  %v23 = vcombine.high %v19, %v19
  %v25 = vunpack.c.l.s4 1983009808
  %v26 = vunpack.c.0.s8 %v25
  %v27 = vlaneseq
  %v28 = vshrl.u32 %v27, 7
  %v29 = vsub.s32 %v26, %v28
  %v30 = vrot.slane %v19, %v29
  %v32 = vunpack.c.l.s4 1983009808
  %v33 = vunpack.c.0.s8 %v32
  %v34 = vlaneseq
  %v35 = vshrl.u32 %v34, 7
  %v36 = vsub.s32 %v33, %v35
  %v37 = vrot.slane %v23, %v36
  %v38 = vcombine.high %v30, %v30
  %v39 = vcombine.high %v37, %v37
  %v40 = vcombine.high %v20, %v20
  %v42 = vunpack.c.l.s4 1983009808
  %v43 = vunpack.c.0.s8 %v42
  %v44 = vlaneseq
  %v45 = vshrl.u32 %v44, 7
  %v46 = vsub.s32 %v43, %v45
  %v47 = vrot.slane %v20, %v46
  %v49 = vunpack.c.l.s4 1983009808
  %v50 = vunpack.c.0.s8 %v49
  %v51 = vlaneseq
  %v52 = vshrl.u32 %v51, 7
  %v53 = vsub.s32 %v50, %v52
  %v54 = vrot.slane %v40, %v53
  %v55 = vcombine.high %v47, %v47
  %v56 = vcombine.high %v54, %v54
  %vm65 = vcmask 1041408
  %v66 = vsel %vm65, %v30, 0.0
  %v67 = vsel %vm65, %v38, 0.0
  %v68 = vadd.f32 %v66, %v67
  %v69 = vsel %vm65, %v37, 0.0
  %v70 = vadd.f32 %v68, %v69
  %v71 = vsel %vm65, %v39, 0.0
  %v72 = vadd.f32 %v70, %v71
  %v73 = vsel %vm65, %v47, 0.0
  %v74 = vadd.f32 %v72, %v73
  %v75 = vsel %vm65, %v55, 0.0
  %v76 = vadd.f32 %v74, %v75
  %v77 = vsel %vm65, %v54, 0.0
  %v78 = vadd.f32 %v76, %v77
  %v79 = vsel %vm65, %v56, 0.0
  %v80 = vadd.f32 %v78, %v79
  %81 = vadd.xlane.f32.xlu0 %v80
  %v82 = vpop.xlane.xlu0 %81
  %v83 = vrcp.pop 1024.0
  %v84 = vmul.f32 %v82, %v83
  %v87 = vunpack.c.l.s4 269488144
  %v88 = vunpack.c.0.s8 %v87
  %v89 = vlaneseq
  %v90 = vshrl.u32 %v89, 7
  %v91 = vsub.s32 %v88, %v90
  %v92 = vrot.slane %v84, %v91
  %v94 = vsub.f32 %v19, %v92
  %v95 = vsub.f32 %v20, %v92
  %v96 = vmul.f32 %v94, %v94
  %v97 = vmul.f32 %v95, %v95
  %v100 = vcombine.high %v96, %v96
  %v102 = vunpack.c.l.s4 1983009808
  %v103 = vunpack.c.0.s8 %v102
  %v104 = vlaneseq
  %v105 = vshrl.u32 %v104, 7
  %v106 = vsub.s32 %v103, %v105
  %v107 = vrot.slane %v96, %v106
  %v109 = vunpack.c.l.s4 1983009808
  %v110 = vunpack.c.0.s8 %v109
  %v111 = vlaneseq
  %v112 = vshrl.u32 %v111, 7
  %v113 = vsub.s32 %v110, %v112
  %v114 = vrot.slane %v100, %v113
  %v115 = vcombine.high %v107, %v107
  %v116 = vcombine.high %v114, %v114
  %v117 = vcombine.high %v97, %v97
  %v119 = vunpack.c.l.s4 1983009808
  %v120 = vunpack.c.0.s8 %v119
  %v121 = vlaneseq
  %v122 = vshrl.u32 %v121, 7
  %v123 = vsub.s32 %v120, %v122
  %v124 = vrot.slane %v97, %v123
  %v126 = vunpack.c.l.s4 1983009808
  %v127 = vunpack.c.0.s8 %v126
  %v128 = vlaneseq
  %v129 = vshrl.u32 %v128, 7
  %v130 = vsub.s32 %v127, %v129
  %v131 = vrot.slane %v117, %v130
  %v132 = vcombine.high %v124, %v124
  %v133 = vcombine.high %v131, %v131
  %v142 = vsel %vm65, %v107, 0.0
  %v143 = vsel %vm65, %v115, 0.0
  %v144 = vadd.f32 %v142, %v143
  %v145 = vsel %vm65, %v114, 0.0
  %v146 = vadd.f32 %v144, %v145
  %v147 = vsel %vm65, %v116, 0.0
  %v148 = vadd.f32 %v146, %v147
  %v149 = vsel %vm65, %v124, 0.0
  %v150 = vadd.f32 %v148, %v149
  %v151 = vsel %vm65, %v132, 0.0
  %v152 = vadd.f32 %v150, %v151
  %v153 = vsel %vm65, %v131, 0.0
  %v154 = vadd.f32 %v152, %v153
  %v155 = vsel %vm65, %v133, 0.0
  %v156 = vadd.f32 %v154, %v155
  %157 = vadd.xlane.f32.xlu0 %v156
  %v158 = vpop.xlane.xlu0 %157
  %v159 = vmul.f32 %v158, %v83
  %v160 = vstv %s18
  %v161 = vadd.f32 %v159, %v160
  %v162 = vrsqrt.pop %v161
  %v165 = vunpack.c.l.s4 269488144
  %v166 = vunpack.c.0.s8 %v165
  %v167 = vlaneseq
  %v168 = vshrl.u32 %v167, 7
  %v169 = vsub.s32 %v166, %v168
  %v170 = vrot.slane %v162, %v169
  %v172 = vmul.f32 %v94, %v170
  %v173 = vmul.f32 %v95, %v170
  %v174 = vld [vmem:[%s2] sm:$0xff]
  %v176 = vlaneseq
  %v177 = vshrl.u32 %v176, 7
  %v178 = vsub.s32 0, %v177
  %v179 = vrot.slane %v174, %v178
  %v180 = vlaneseq
  %v181 = vshrl.u32 %v180, 7
  %v182 = vsub.s32 1, %v181
  %v183 = vrot.slane %v174, %v182
  %v184 = vlaneseq
  %v185 = vshrl.u32 %v184, 7
  %v186 = vsub.s32 2, %v185
  %v187 = vrot.slane %v174, %v186
  %v188 = vlaneseq
  %v189 = vshrl.u32 %v188, 7
  %v190 = vsub.s32 3, %v189
  %v191 = vrot.slane %v174, %v190
  %v192 = vlaneseq
  %v193 = vshrl.u32 %v192, 7
  %v194 = vsub.s32 4, %v193
  %v195 = vrot.slane %v174, %v194
  %v196 = vlaneseq
  %v197 = vshrl.u32 %v196, 7
  %v198 = vsub.s32 5, %v197
  %v199 = vrot.slane %v174, %v198
  %v200 = vlaneseq
  %v201 = vshrl.u32 %v200, 7
  %v202 = vsub.s32 6, %v201
  %v203 = vrot.slane %v174, %v202
  %v204 = vlaneseq
  %v205 = vshrl.u32 %v204, 7
  %v206 = vsub.s32 7, %v205
  %v207 = vrot.slane %v174, %v206
  %v208 = vcombine.low %v179, %v183
  %v209 = vcombine.low %v187, %v191
  %v211 = vunpack.c.l.s4 1983009808
  %v212 = vunpack.c.0.s8 %v211
  %v213 = vlaneseq
  %v214 = vshrl.u32 %v213, 7
  %v215 = vsub.s32 %v212, %v214
  %v216 = vrot.slane %v208, %v215
  %v218 = vunpack.c.l.s4 1983009808
  %v219 = vunpack.c.0.s8 %v218
  %v220 = vlaneseq
  %v221 = vshrl.u32 %v220, 7
  %v222 = vsub.s32 %v219, %v221
  %v223 = vrot.slane %v209, %v222
  %v224 = vcombine.low %v216, %v223
  %v225 = vcombine.low %v195, %v199
  %v226 = vcombine.low %v203, %v207
  %v228 = vunpack.c.l.s4 1983009808
  %v229 = vunpack.c.0.s8 %v228
  %v230 = vlaneseq
  %v231 = vshrl.u32 %v230, 7
  %v232 = vsub.s32 %v229, %v231
  %v233 = vrot.slane %v225, %v232
  %v235 = vunpack.c.l.s4 1983009808
  %v236 = vunpack.c.0.s8 %v235
  %v237 = vlaneseq
  %v238 = vshrl.u32 %v237, 7
  %v239 = vsub.s32 %v236, %v238
  %v240 = vrot.slane %v226, %v239
  %v241 = vcombine.low %v233, %v240
  %v244 = vmul.f32 %v172, %v224
  %v245 = vmul.f32 %v173, %v241
  %v246 = vld [vmem:[%s3] sm:$0xff]
  %v248 = vlaneseq
  %v249 = vshrl.u32 %v248, 7
  %v250 = vsub.s32 0, %v249
  %v251 = vrot.slane %v246, %v250
  %v252 = vlaneseq
  %v253 = vshrl.u32 %v252, 7
  %v254 = vsub.s32 1, %v253
  %v255 = vrot.slane %v246, %v254
  %v256 = vlaneseq
  %v257 = vshrl.u32 %v256, 7
  %v258 = vsub.s32 2, %v257
  %v259 = vrot.slane %v246, %v258
  %v260 = vlaneseq
  %v261 = vshrl.u32 %v260, 7
  %v262 = vsub.s32 3, %v261
  %v263 = vrot.slane %v246, %v262
  %v264 = vlaneseq
  %v265 = vshrl.u32 %v264, 7
  %v266 = vsub.s32 4, %v265
  %v267 = vrot.slane %v246, %v266
  %v268 = vlaneseq
  %v269 = vshrl.u32 %v268, 7
  %v270 = vsub.s32 5, %v269
  %v271 = vrot.slane %v246, %v270
  %v272 = vlaneseq
  %v273 = vshrl.u32 %v272, 7
  %v274 = vsub.s32 6, %v273
  %v275 = vrot.slane %v246, %v274
  %v276 = vlaneseq
  %v277 = vshrl.u32 %v276, 7
  %v278 = vsub.s32 7, %v277
  %v279 = vrot.slane %v246, %v278
  %v280 = vcombine.low %v251, %v255
  %v281 = vcombine.low %v259, %v263
  %v283 = vunpack.c.l.s4 1983009808
  %v284 = vunpack.c.0.s8 %v283
  %v285 = vlaneseq
  %v286 = vshrl.u32 %v285, 7
  %v287 = vsub.s32 %v284, %v286
  %v288 = vrot.slane %v280, %v287
  %v290 = vunpack.c.l.s4 1983009808
  %v291 = vunpack.c.0.s8 %v290
  %v292 = vlaneseq
  %v293 = vshrl.u32 %v292, 7
  %v294 = vsub.s32 %v291, %v293
  %v295 = vrot.slane %v281, %v294
  %v296 = vcombine.low %v288, %v295
  %v297 = vcombine.low %v267, %v271
  %v298 = vcombine.low %v275, %v279
  %v300 = vunpack.c.l.s4 1983009808
  %v301 = vunpack.c.0.s8 %v300
  %v302 = vlaneseq
  %v303 = vshrl.u32 %v302, 7
  %v304 = vsub.s32 %v301, %v303
  %v305 = vrot.slane %v297, %v304
  %v307 = vunpack.c.l.s4 1983009808
  %v308 = vunpack.c.0.s8 %v307
  %v309 = vlaneseq
  %v310 = vshrl.u32 %v309, 7
  %v311 = vsub.s32 %v308, %v310
  %v312 = vrot.slane %v298, %v311
  %v313 = vcombine.low %v305, %v312
  %v316 = vadd.f32 %v244, %v296
  %v317 = vadd.f32 %v245, %v313
  %318 = vst [vmem:[%s4] sm:$0xff] %v316
  %319 = vst [vmem:[%s4 + $0x8] sm:$0xff] %v317
  // Predicated region
  $region18: #{simple_feature_processor_forward.1} parent=0 // pred_check
    _
  $region19: #{simple_feature_processor_forward.1} parent=0 // pred_check_branch
    %321 = sbr.rel (0) target = $region21
  $region20: #{simple_feature_processor_forward.1} parent=0 // pred_region
    _
  $region21: #{simple_feature_processor_forward.1} parent=0 // pred_fallthru
    _
  // Predicated region
  $region22: #{simple_feature_processor_forward.1} parent=0 // pred_check
    _
  $region23: #{simple_feature_processor_forward.1} parent=0 // pred_check_branch
    %323 = sbr.rel (0) target = $region25
  $region24: #{simple_feature_processor_forward.1} parent=0 // pred_region
    _
  $region25: #{simple_feature_processor_forward.1} parent=0 // pred_fallthru
    _

</llo_original>
